<compile_context>
chip_gen: v7x
topology: tpu7x:2x2x1
jax: 0.10.0
libtpu: 0.0.40
codegen_flags: <defaults>
</compile_context>

<pallas_src>
import functools
from typing import NamedTuple

import numpy as np
import jax
import jax.numpy as jnp
from jax.experimental import pallas as pl
from jax.experimental.pallas import tpu as pltpu


# ---------------------------------------------------------------------------
# helpers
# ---------------------------------------------------------------------------
def _choose_row_block(R, L, itemsize):
    """Rows of (B*C, L) per grid step.  Target ~4 MiB of x per block (>=1 MiB
    tiles reach ~85% of HBM roofline); double-buffered in+out plus optional
    per-op extras still fits every generation's VMEM (v7x: 64 MiB physical)."""
    if R <= 8:
        return int(R)                       # full-extent second-to-last dim
    target_bytes = 4 << 20
    rows = max(8, (target_bytes // max(1, itemsize * L)) // 8 * 8)
    return int(min(rows, (R // 8) * 8))     # last block may be partial (masked)


def _vmem_limit_bytes():
    # Chip-aware scoped-VMEM limit: 128-MiB chips (v5e/v6e) -> 64 MiB,
    # v7x (64 MiB physical) -> ~40 MiB.
    try:
        cap = int(pltpu.get_tpu_info().vmem_capacity_bytes)
    except Exception:
        cap = 64 << 20
    return int(min(max(cap - (24 << 20), 32 << 20), 64 << 20))


class _OpDesc(NamedTuple):
    gather: bool = False      # time-axis index gather (Window_slice / block shuffles)
    scale: bool = False       # per-row multiplicative factor (Scaling / Flip_Y)
    noise: bool = False       # additive Gaussian noise (Jitter)
    drop: bool = False        # contiguous time block masked (Drop/Random_block)
    repl_noise: bool = False  # masked block replaced by Gaussian noise (Random_block)


def _apply_gather(x, idx_row, mode):
    """x: (rows, L); idx_row: (1, L) int32; gathers along the lane axis."""
    if mode == "take":
        return jnp.take(x, idx_row[0], axis=1,
                        mode=jax.lax.GatherScatterMode.PROMISE_IN_BOUNDS)
    # "tala": broadcast-index take_along_axis fallback
    return jnp.take_along_axis(x, jnp.broadcast_to(idx_row, x.shape), axis=1)


def _std_normal(shape, mode):
    """In-kernel standard normal (pltpu.prng_seed must have been called)."""
    if mode == "stateful":
        return pltpu.stateful_normal(shape, jnp.float32)

    # "boxmuller": two uniform draws; log/sqrt/cos run on the EUP slot.
    def unit(s):
        bits = pltpu.bitcast(pltpu.prng_random_bits(s), jnp.uint32)
        f = pltpu.bitcast((bits >> jnp.uint32(9)) | jnp.uint32(0x3F800000),
                          jnp.float32)
        return f - 1.0                                  # uniform in [0, 1)

    u1 = unit(shape)
    u2 = unit(shape)
    r = jnp.sqrt(-2.0 * jnp.log(1.0 - u1))              # 1 - u1 in (0, 1]
    return r * jnp.cos((2.0 * np.pi) * u2)


# ---------------------------------------------------------------------------
# capability probes (tiny pallas kernels run once; graceful fallback otherwise)
# ---------------------------------------------------------------------------
@functools.lru_cache(maxsize=None)
def _noise_mode():
    """'stateful' | 'boxmuller' (in-kernel TPU PRNG) or 'host' (noise streamed in)."""
    smem = pl.BlockSpec(memory_space=pltpu.MemorySpace.SMEM)
    for mode in ("stateful", "boxmuller"):
        def kernel(s_ref, o_ref, mode=mode):
            pltpu.prng_seed(s_ref[0] + 7)
            o_ref[...] = _std_normal(o_ref.shape, mode)
        try:
            y = np.asarray(pl.pallas_call(
                kernel,
                out_shape=jax.ShapeDtypeStruct((8, 128), jnp.float32),
                in_specs=[smem],
            )(jnp.asarray([3], jnp.int32)))
            if np.all(np.isfinite(y)) and float(np.std(y)) > 0.1:
                return mode
        except Exception:
            pass
    return "host"


@functools.lru_cache(maxsize=None)
def _gather_mode(L):
    """'take' | 'tala' (in-kernel dynamic lane gather) or 'onehot' (MXU matmul)."""
    x_np = np.arange(8 * L, dtype=np.float32).reshape(8, L)
    rev = np.arange(L - 1, -1, -1, dtype=np.int32)[None, :]
    for mode in ("take", "tala"):
        def kernel(x_ref, i_ref, o_ref, mode=mode):
            o_ref[...] = _apply_gather(x_ref[...], i_ref[...], mode)
        try:
            y = np.asarray(pl.pallas_call(
                kernel, out_shape=jax.ShapeDtypeStruct((8, L), jnp.float32),
            )(jnp.asarray(x_np), jnp.asarray(rev)))
            if np.allclose(y, x_np[:, ::-1]):
                return mode
        except Exception:
            pass
    return "onehot"


# ---------------------------------------------------------------------------
# fused Pallas kernel: applies the whole sampled op chain to one (rows, L) tile
# ---------------------------------------------------------------------------
def _make_fused_kernel(descs, compute_dtype, gather_mode, noise_mode):
    use_prng = noise_mode in ("stateful", "boxmuller")

    def kernel(ip_ref, fp_ref, x_ref, *rest):
        o_ref = rest[-1]
        extras = rest[:-1]
        x = x_ref[...].astype(compute_dtype)
        t_iota = None
        ei = 0
        for k, od in enumerate(descs):
            if od.gather:
                g = extras[ei][...]
                ei += 1
                if gather_mode == "onehot":
                    # One-hot permutation is a resident VMEM operand (constant
                    # block index -> fetched once) applied on the MXU.
                    x = jnp.dot(x, g.astype(compute_dtype),
                                preferred_element_type=jnp.float32
                                ).astype(compute_dtype)
                else:
                    x = _apply_gather(x, g, gather_mode)
            if od.scale:
                x = x * extras[ei][...].astype(compute_dtype)   # (rows,1) broadcast
                ei += 1
            if use_prng and (od.noise or od.repl_noise):
                # Seed salted by op index and grid step to avoid stream overlap.
                pltpu.prng_seed(ip_ref[4 * k + 0]
                                + pl.program_id(0) * 1000003 + k * 7919)
            if od.noise:
                if use_prng:
                    z = _std_normal(x.shape, noise_mode)
                    x = x + (fp_ref[2 * k + 0] * z).astype(compute_dtype)
                else:
                    x = x + extras[ei][...].astype(compute_dtype)
                    ei += 1
            if od.drop:
                if t_iota is None:
                    t_iota = jax.lax.broadcasted_iota(jnp.int32, x.shape, 1)
                start = ip_ref[4 * k + 1]
                blk = ip_ref[4 * k + 2]
                in_block = (t_iota >= start) & (t_iota < start + blk)
                if od.repl_noise:
                    if use_prng:
                        repl = _std_normal(x.shape, noise_mode).astype(compute_dtype)
                    else:
                        repl = extras[ei][...].astype(compute_dtype)
                        ei += 1
                else:
                    repl = jnp.zeros_like(x)
                x = jnp.where(in_block, repl, x)
        o_ref[...] = x.astype(o_ref.dtype)

    return kernel


@functools.lru_cache(maxsize=None)
def _build_fused_call(descs, R, L, dtype_name, gather_mode, noise_mode):
    dtype = jnp.dtype(dtype_name)
    compute_dtype = jnp.bfloat16 if dtype == jnp.bfloat16 else jnp.float32
    rows = _choose_row_block(R, L, dtype.itemsize)
    grid = (pl.cdiv(R, rows),)
    use_prng = noise_mode in ("stateful", "boxmuller")

    kernel = _make_fused_kernel(descs, compute_dtype, gather_mode, noise_mode)

    smem = pl.BlockSpec(memory_space=pltpu.MemorySpace.SMEM)
    data_spec = pl.BlockSpec((rows, L), lambda r: (r, 0))
    extra_specs = []
    for od in descs:
        if od.gather:
            if gather_mode == "onehot":
                # TODO(synk): K-tile this (L, L) resident operand for very large
                # L (>= ~2048) to respect v7x's 64 MiB VMEM.
                extra_specs.append(pl.BlockSpec((L, L), lambda r: (0, 0)))
            else:
                extra_specs.append(pl.BlockSpec((1, L), lambda r: (0, 0)))
        if od.scale:
            extra_specs.append(pl.BlockSpec((rows, 1), lambda r: (r, 0)))
        if od.noise and not use_prng:
            extra_specs.append(pl.BlockSpec((rows, L), lambda r: (r, 0)))
        if od.repl_noise and not use_prng:
            extra_specs.append(pl.BlockSpec((rows, L), lambda r: (r, 0)))

    call = pl.pallas_call(
        kernel,
        out_shape=jax.ShapeDtypeStruct((R, L), dtype),
        grid_spec=pltpu.PrefetchScalarGridSpec(
            num_scalar_prefetch=0,
            grid=grid,
            in_specs=[smem, smem, data_spec] + extra_specs,
            out_specs=data_spec,
        ),
        compiler_params=pltpu.CompilerParams(
            # "parallel" lets the row-block axis shard across TensorCores on
            # multi-TC chips (v7x).  TODO(synk): evaluate pltpu.CORE_PARALLEL
            # explicitly once uniformly available.
            dimension_semantics=("parallel",),
            vmem_limit_bytes=_vmem_limit_bytes(),
        ),
    )
    return jax.jit(call)


# ---------------------------------------------------------------------------
# RandAugment module (host-side sampling, device-side fused augmentation)
# ---------------------------------------------------------------------------
class RandAugmentPallas:
    """JAX/Pallas port of the time-series RandAugment.forward."""

    def __init__(self, num_ops=1, magnitude=3, augmentation_operations=None,
                 num_magnitude_bins=10 + 1, fill=None, seed=0):
        self.num_ops = num_ops
        self.magnitude = magnitude
        self.num_magnitude_bins = num_magnitude_bins
        self.augmentation_operations = augmentation_operations
        self.fill = fill
        # Host RNG mirrors the reference's host-side torch.randint/.item() draws;
        # sampled values reach the kernel as runtime operands (no recompiles).
        self._rng = np.random.default_rng(seed)
        if (self.magnitude < 1) | (self.magnitude > 10):
            raise ValueError(f'Magnitude must be less than 10. Got {self.magnitude}.')

    def _augmentation_space(self, num_bins):
        dict_op = {
            'Identity': (np.array(0.0), False),
            'Jitter': (np.linspace(0.0, 0.8, num_bins), False),
            'Scaling': (np.linspace(0.0, 0.5, num_bins), False),
            'Flip_Y': (np.array(0.0), False),
            'Window_slice': (1 - np.linspace(0.0, 0.6, num_bins), False),
            'Drop_block': (np.linspace(0.0, 0.8, num_bins), False),
            'Random_block': (np.linspace(0.0, 0.8, num_bins), False),
            'Permute_block': (np.linspace(0.0, 0.8, num_bins), False),
            'Shuffle_block': (np.linspace(0.0, 0.8, num_bins), False),
        }
        if self.augmentation_operations is not None:
            dict_op = {k: v for k, v in dict_op.items()
                       if k in self.augmentation_operations}
        return dict_op

    def _build_op(self, op_name, magnitude, R, L, gather_mode, noise_mode):
        rng = self._rng
        host_noise = (noise_mode == "host")
        seed = int(rng.integers(0, 2 ** 30))
        start = 0
        blk = 0
        sigma = 0.0
        extras = []

        def _gather_extra(idx):
            if gather_mode == "onehot":
                onehot = np.zeros((L, L), np.float32)
                onehot[idx, np.arange(L)] = 1.0         # x_new[:, j] = x[:, idx[j]]
                extras.append(jnp.asarray(onehot))
            else:
                extras.append(jnp.asarray(idx[None, :].astype(np.int32)))

        if op_name == 'Identity':
            desc = _OpDesc()
        elif op_name == 'Jitter':
            sigma = float(magnitude)                     # x + sigma * N(0, 1)
            if host_noise:
                extras.append(jnp.asarray(
                    (magnitude * rng.standard_normal((R, L))).astype(np.float32)))
            desc = _OpDesc(noise=True)
        elif op_name == 'Scaling':
            factors = 1.0 + magnitude * rng.standard_normal((R, 1))
            extras.append(jnp.asarray(factors.astype(np.float32)))
            desc = _OpDesc(scale=True)
        elif op_name == 'Flip_Y':
            extras.append(jnp.full((R, 1), -1.0, dtype=jnp.float32))
            desc = _OpDesc(scale=True)
        elif op_name == 'Window_slice':
            # TODO(synk): ts.window_slice source unavailable; the reference calls
            # it without magnitude, so crop a fixed 0.9*L window at a random
            # start and nearest-resample back to L.
            reduce_ratio = 0.9
            win = max(1, int(round(reduce_ratio * L)))
            s0 = int(rng.integers(0, L - win + 1))
            idx = np.clip(np.round(np.linspace(s0, s0 + win - 1, L)),
                          0, L - 1).astype(np.int32)
            _gather_extra(idx)
            desc = _OpDesc(gather=True)
        elif op_name == 'Drop_block':
            blk = int(min(max(1, round(magnitude * L)), L))
            start = int(rng.integers(0, max(1, L - blk + 1)))
            desc = _OpDesc(drop=True)
        elif op_name == 'Random_block':
            blk = int(min(max(1, round(magnitude * L)), L))
            start = int(rng.integers(0, max(1, L - blk + 1)))
            if host_noise:
                extras.append(jnp.asarray(
                    rng.standard_normal((R, L)).astype(np.float32)))
            desc = _OpDesc(drop=True, repl_noise=True)
        elif op_name in ('Shuffle_block', 'Permute_block'):
            # TODO(synk): ts.random_block_shuffle / 'Permute_block' sources
            # unavailable; split the time axis into magnitude-dependent
            # contiguous segments and shuffle their order.
            n_seg = int(max(2, min(L, round(1 + magnitude * 10))))
            bounds = [int(round(s * L / n_seg)) for s in range(n_seg + 1)]
            order = rng.permutation(n_seg)
            idx = np.concatenate(
                [np.arange(bounds[o], bounds[o + 1], dtype=np.int32) for o in order])
            _gather_extra(idx)
            desc = _OpDesc(gather=True)
        else:
            raise ValueError(f'The provided operator {op_name} is not recognized.')

        ip_row = [seed, start, blk, 0]
        fp_row = [float(sigma), 0.0]
        return desc, ip_row, fp_row, extras

    def __call__(self, x, nb_epoch):
        op_meta = self._augmentation_space(self.num_magnitude_bins)
        names = list(op_meta.keys())
        B, C, L = x.shape
        R = int(B * C)
        L = int(L)

        # Host-side op / magnitude sampling (mirrors reference torch draws).
        ops = []
        for _ in range(self.num_ops):
            op_index = int(self._rng.integers(0, len(names)))
            op_name = names[op_index]
            magnitudes, _signed = op_meta[op_name]
            if nb_epoch < 15:
                bounded_magnitude = int(nb_epoch / 25 * self.magnitude)
            else:
                bounded_magnitude = self.magnitude
            if magnitudes.ndim > 0:
                lo = float(magnitudes[0])
                hi = float(magnitudes[bounded_magnitude])
                magnitude = float(self._rng.random() * (hi - lo) + lo)
            else:
                magnitude = 0.0
            ops.append((op_name, magnitude))

        needs_gather = any(n in ('Window_slice', 'Shuffle_block', 'Permute_block')
                           for n, _ in ops)
        needs_noise = any(n in ('Jitter', 'Random_block') for n, _ in ops)
        gather_mode = _gather_mode(L) if needs_gather else "none"
        noise_mode = _noise_mode() if needs_noise else "none"

        descs, ipar, fpar, extras = [], [], [], []
        for op_name, magnitude in ops:
            desc, ip_row, fp_row, ex = self._build_op(
                op_name, magnitude, R, L, gather_mode, noise_mode)
            descs.append(desc)
            ipar.extend(ip_row)
            fpar.extend(fp_row)
            extras.extend(ex)

        iparams = jnp.asarray(ipar, dtype=jnp.int32)
        fparams = jnp.asarray(fpar, dtype=jnp.float32)
        run = _build_fused_call(tuple(descs), R, L, jnp.dtype(x.dtype).name,
                                gather_mode, noise_mode)
        y2 = run(iparams, fparams, x.reshape(R, L), *extras)
        return y2.reshape(B, C, L)


# ---------------------------------------------------------------------------
if __name__ == "__main__":
    key = jax.random.PRNGKey(0)
    B, C, L = 2, 8, 128                       # small [batch, channels, time] signal
    x = jax.random.normal(key, (B, C, L), jnp.float32)

    # Deterministic per-op smoke test: every op exercises the fused kernel.
    for name in ['Identity', 'Jitter', 'Scaling', 'Flip_Y', 'Window_slice',
                 'Drop_block', 'Random_block', 'Shuffle_block', 'Permute_block']:
        aug1 = RandAugmentPallas(num_ops=1, magnitude=3,
                                 augmentation_operations=[name], seed=123)
        y = jax.block_until_ready(aug1(x, nb_epoch=20))
        assert y.shape == x.shape and y.dtype == x.dtype, name
        assert bool(jnp.all(jnp.isfinite(y))), name

    # Ops with exactly checkable results.
    y_id = RandAugmentPallas(1, 3, ['Identity'], seed=7)(x, 20)
    assert np.allclose(np.asarray(y_id), np.asarray(x))
    y_fl = RandAugmentPallas(1, 3, ['Flip_Y'], seed=7)(x, 20)
    assert np.allclose(np.asarray(y_fl), -np.asarray(x))

    # Non-128-multiple time length exercises the full-extent (no-padding) path.
    x2 = jax.random.normal(jax.random.PRNGKey(1), (2, 3, 100), jnp.float32)
    y2 = RandAugmentPallas(1, 3, ['Flip_Y'], seed=11)(x2, 20)
    assert np.allclose(np.asarray(y2), -np.asarray(x2))
    y3 = jax.block_until_ready(
        RandAugmentPallas(1, 3, ['Drop_block'], seed=11)(x2, 20))
    assert bool(jnp.all(jnp.isfinite(y3)))

    # Full RandAugment: num_ops=2 over the default op space, fused in one kernel.
    aug = RandAugmentPallas(num_ops=2, magnitude=3, seed=0)
    out = jax.block_until_ready(aug(x, nb_epoch=20))
    assert out.shape == x.shape and out.dtype == x.dtype
    assert bool(jnp.all(jnp.isfinite(out)))
    print("KERNEL_OK")
</pallas_src>

<mosaic_0001>
module attributes {stable_mosaic.version = 11 : i64} {
  func.func @kernel(%arg0: i32, %arg1: memref<4xi32, #tpu.memory_space<smem>>, %arg2: memref<2xf32, #tpu.memory_space<smem>>, %arg3: memref<16x128xf32, #tpu.memory_space<vmem>>, %arg4: memref<16x128xf32, #tpu.memory_space<vmem>>) attributes {dimension_semantics = [#tpu.dimension_semantics<parallel>], iteration_bounds = array<i64: 1>, scalar_prefetch = 0 : i64, scratch_operands = 0 : i64, tpu.core_type = #tpu.core_type<tc>, window_params = [{transform_indices = @transform_0, window_bounds = array<i64: 4>}, {transform_indices = @transform_1, window_bounds = array<i64: 2>}, {transform_indices = @transform_2, window_bounds = array<i64: 16, 128>}, {transform_indices = @transform_3, window_bounds = array<i64: 16, 128>}]} {
    %c0 = arith.constant 0 : index
    %c0_0 = arith.constant 0 : index
    %0 = vector.load %arg3[%c0, %c0_0] : memref<16x128xf32, #tpu.memory_space<vmem>>, vector<16x128xf32>
    %c0_1 = arith.constant 0 : index
    %c0_2 = arith.constant 0 : index
    %1 = vector.load %arg4[%c0_1, %c0_2] : memref<16x128xf32, #tpu.memory_space<vmem>>, vector<16x128xf32>
    tpu.vector_store %arg4[%c0_1, %c0_2], %0 {strides = array<i32>} : memref<16x128xf32, #tpu.memory_space<vmem>>, vector<16x128xf32>,
    return
  }
  func.func @transform_0(%arg0: i32) -> i32 {
    %c0_i32 = arith.constant 0 : i32
    %c0_i32_0 = arith.constant 0 : i32
    return %c0_i32 : i32
  }
  func.func @transform_1(%arg0: i32) -> i32 {
    %c0_i32 = arith.constant 0 : i32
    %c0_i32_0 = arith.constant 0 : i32
    return %c0_i32 : i32
  }
  func.func @transform_2(%arg0: i32) -> (i32, i32) {
    %c0_i32 = arith.constant 0 : i32
    %c0_i32_0 = arith.constant 0 : i32
    return %arg0, %c0_i32 : i32, i32
  }
  func.func @transform_3(%arg0: i32) -> (i32, i32) {
    %c0_i32 = arith.constant 0 : i32
    %c0_i32_0 = arith.constant 0 : i32
    return %arg0, %c0_i32 : i32, i32
  }
}

</mosaic_0001>

<llo_original>
// kernel: tpu_custom_call.1
$region0: #{tpu_custom_call.1}
  #allocation0 [shape = 'u32[]', space=smem, size = 0x4, offset = 0x4, fixed_abs, tag = 'smem constant byte address 0x4 - core index']
  #allocation1 [shape = 'u32[144,128]{1,0:T(1,128)}', space=vmem, size = 0x12000, scoped, tag = 'internal scratch']
  %s0 = inlined_call_operand.hbm [shape: s32[4], index: 0, kind: input, shape index: {}]
  %s1 = inlined_call_operand.vmem [shape: f32[2], index: 1, kind: input, shape index: {}]
  %s2 = inlined_call_operand.hbm [shape: f32[16,128], index: 2, kind: input, shape index: {}]
  %s3 = inlined_call_operand.hbm [shape: f32[16,128], index: 3, kind: output, shape index: {}]
  %s4 = sld [smem:[#allocation0]]
  $region34: #{tpu_custom_call.1} parent=0
    _
  %s6 = ssub.s32 1, %s4
  %s7 = scalar_select 0, %s6, %s4
  $region1: #{tpu_custom_call.1} parent=0
    #allocation2 [shape = 'u8[512]{0}', space=smem, size = 0x200, scoped, tag = 'input window, operand 0, single buffered']
    #allocation3 [shape = 's32[1]{0}', space=sflag, size = 0x4, scoped, tag = 'scoped memory for tpu_custom_call.1']
    #allocation4 [shape = 's32[1]{0}', space=sflag, size = 0x4, scoped, tag = 'scoped memory for tpu_custom_call.1']
    #allocation5 [shape = 's32[1]{0}', space=sflag, size = 0x4, scoped, tag = 'scoped memory for tpu_custom_call.1']
    #allocation6 [shape = 's32[1]{0}', space=sflag, size = 0x4, scoped, tag = 'scoped memory for tpu_custom_call.1']
    #allocation7 [shape = 'u8[512]{0}', space=smem, size = 0x200, scoped, tag = 'input window, operand 1, single buffered']
    #allocation8 [shape = 'u8[8192]{0}', space=vmem, size = 0x2000, scoped, tag = 'input window, operand 2, single buffered']
    #allocation9 [shape = 'u8[8192]{0}', space=vmem, size = 0x2000, scoped, tag = 'output window, operand 0, single buffered']
    %8 = vsyncpa [#allocation5], 0
    %9 = vsyncpa [#allocation6], 0
    %10 = vsyncpa [#allocation3], 0
    %11 = vsyncpa [#allocation4], 0
    // Predicated region
    $region2: #{tpu_custom_call.1} parent=1 // pred_check
      _
    $region3: #{tpu_custom_call.1} parent=1 // pred_check_branch
      %13 = sbr.rel (0) target = $region5
    $region4: #{tpu_custom_call.1} parent=1 // pred_region
      %s15 = ssub.s32 16, 16
      %16 = vsyncadd [#allocation5], %s15
      %19 = dma.hbm_to_smem %s0, 16, [#allocation2], [#allocation5]
    $region5: #{tpu_custom_call.1} parent=1 // pred_fallthru
      _
    // Predicated region
    $region6: #{tpu_custom_call.1} parent=1 // pred_check
      _
    $region7: #{tpu_custom_call.1} parent=1 // pred_check_branch
      %21 = sbr.rel (0) target = $region9
    $region8: #{tpu_custom_call.1} parent=1 // pred_region
      %s23 = ssub.s32 16, 16
      %24 = vsyncadd [#allocation6], %s23
      %s26 = sshll.u32 %s1, 4
      %s27 = int_to_ptr.vmem [resolvable:$true] %s26
      %29 = dma.vmem_to_smem %s27, 16, [#allocation7], [#allocation6]
    $region9: #{tpu_custom_call.1} parent=1 // pred_fallthru
      _
    // Predicated region
    $region10: #{tpu_custom_call.1} parent=1 // pred_check
      _
    $region11: #{tpu_custom_call.1} parent=1 // pred_check_branch
      %31 = sbr.rel (0) target = $region13
    $region12: #{tpu_custom_call.1} parent=1 // pred_region
      %s33 = ssub.s32 256, 256
      %34 = vsyncadd [#allocation3], %s33
      %s35 = sshll.u32 [#allocation8], 4
      %s36 = int_to_ptr.vmem [resolvable:$true] %s35
      %41 = dma.hbm_to_vmem [thread:$0]  %s2, 256, %s36, [#allocation3], 128, 128, 8
    $region13: #{tpu_custom_call.1} parent=1 // pred_fallthru
      _
    // Predicated region
    $region14: #{tpu_custom_call.1} parent=1 // pred_check
      _
    $region15: #{tpu_custom_call.1} parent=1 // pred_check_branch
      %43 = sbr.rel (0) target = $region17
    $region16: #{tpu_custom_call.1} parent=1 // pred_region
      %44 = dma.done [#allocation5], 16
    $region17: #{tpu_custom_call.1} parent=1 // pred_fallthru
      _
    // Predicated region
    $region18: #{tpu_custom_call.1} parent=1 // pred_check
      _
    $region19: #{tpu_custom_call.1} parent=1 // pred_check_branch
      %46 = sbr.rel (0) target = $region21
    $region20: #{tpu_custom_call.1} parent=1 // pred_region
      %47 = dma.done [#allocation6], 16
    $region21: #{tpu_custom_call.1} parent=1 // pred_fallthru
      _
    // Predicated region
    $region22: #{tpu_custom_call.1} parent=1 // pred_check
      _
    $region23: #{tpu_custom_call.1} parent=1 // pred_check_branch
      %49 = sbr.rel (0) target = $region25
    $region24: #{tpu_custom_call.1} parent=1 // pred_region
      %50 = dma.done [#allocation3], 256
    $region25: #{tpu_custom_call.1} parent=1 // pred_fallthru
      _
    %51 = sfence
    %v52 = vld [vmem:[#allocation8] sm:$0xff]
    %v53 = vld [vmem:[#allocation8 + $0x8] sm:$0xff]
    %54 = vst [vmem:[#allocation9] sm:$0xff] %v52
    %55 = vst [vmem:[#allocation9 + $0x8] sm:$0xff] %v53
    // Predicated region
    $region26: #{tpu_custom_call.1} parent=1 // pred_check
      _
    $region27: #{tpu_custom_call.1} parent=1 // pred_check_branch
      %57 = sbr.rel (0) target = $region29
    $region28: #{tpu_custom_call.1} parent=1 // pred_region
      %s59 = ssub.s32 256, 256
      %60 = vsyncadd [#allocation4], %s59
      %s61 = sshll.u32 [#allocation9], 4
      %s62 = int_to_ptr.vmem [resolvable:$true] %s61
      %67 = dma.vmem_to_hbm [thread:$0]  %s62, 256, %s3, [#allocation4], 128, 128, 8
    $region29: #{tpu_custom_call.1} parent=1 // pred_fallthru
      _
    // Predicated region
    $region30: #{tpu_custom_call.1} parent=1 // pred_check
      _
    $region31: #{tpu_custom_call.1} parent=1 // pred_check_branch
      %69 = sbr.rel (0) target = $region33
    $region32: #{tpu_custom_call.1} parent=1 // pred_region
      %70 = dma.done [#allocation4], 256
    $region33: #{tpu_custom_call.1} parent=1 // pred_fallthru
      _
    %71 = vsyncpa [#allocation3], 1
    %72 = vsyncpa [#allocation4], 1
    %73 = vsyncpa [#allocation5], 1
    %74 = vsyncpa [#allocation6], 1

</llo_original>
